<compile_context>
chip_gen: v5e
topology: v5e:2x2
jax: 0.10.0
libtpu: 0.0.40
codegen_flags: <defaults>
</compile_context>

<pallas_src>
import jax
import jax.numpy as jnp
from jax.experimental import pallas as pl
from jax.experimental.pallas import tpu as pltpu


_LANE = 1024          # lane-dense last dim (multiple of 128)
_BLOCK_ROWS = 512     # (512, 1024) f32 = 2 MiB per block


def _two_step_kernel(p_ref, x_ref, o_ref):
    # p_ref (SMEM scalar prefetch, f32[14]):
    #   [t0_t, t1_t, s0, s1, s2, s3,
    #    inv_div0, off0, shift1, mult1, shift2, mult2, inv_div3, off3]
    t0 = p_ref[0]
    t1 = p_ref[1]
    s0 = p_ref[2]
    s1 = p_ref[3]
    s2 = p_ref[4]
    s3 = p_ref[5]
    inv_div0 = p_ref[6]
    off0 = p_ref[7]
    shift1 = p_ref[8]
    mult1 = p_ref[9]
    shift2 = p_ref[10]
    mult2 = p_ref[11]
    inv_div3 = p_ref[12]
    off3 = p_ref[13]

    # transform: x in [0,1] -> xt in [-1,1]
    xt = 2.0 * x_ref[...] - 1.0

    # CSE per threshold: both branches at a threshold share d and |d|.
    d0 = xt - t0
    ad0 = jnp.abs(d0)
    d1 = xt - t1
    ad1 = jnp.abs(d1)

    def recip(den):
        # EUP approximate reciprocal + one Newton-Raphson step: keeps the
        # divide off the VALU while restoring ~full f32 accuracy.
        r = pl.reciprocal(den, approx=True)
        return r * (2.0 - den * r)

    y0 = d0 * recip(s0 + ad0)
    y1 = d0 * recip(s1 + ad0)
    y2 = d1 * recip(s2 + ad1)
    y3 = d1 * recip(s3 + ad1)

    out0 = y0 * inv_div0 + off0        # external softsign @ t0
    out1 = (y1 + shift1) * mult1       # internal softsign @ t0
    out2 = (y2 + shift2) * mult2       # internal softsign @ t1
    out3 = y3 * inv_div3 + off3        # external softsign @ t1

    zero = jnp.float32(0.0)
    m0 = xt < t0
    m1 = jnp.logical_and(t0 <= xt, xt < zero)
    m2 = jnp.logical_and(zero <= xt, xt < t1)
    m3 = t1 <= xt

    # Selects instead of bool->f32 converts + float-mask multiplies.
    o_ref[...] = (jnp.where(m0, out0, zero)
                  + jnp.where(m1, out1, zero)
                  + jnp.where(m2, out2, zero)
                  + jnp.where(m3, out3, zero))


def two_step_function(x, a0, a1, t0, t1, scales, *, block_rows=_BLOCK_ROWS):
    """x: (N, C, H, W) float in [0, 1]. Returns float32 of the same shape."""
    orig_shape = x.shape
    xf = x.reshape(-1).astype(jnp.float32)
    total = xf.shape[0]

    # ---- Hoisted global reduction (one pure-JAX pass over x) ---------------
    # TODO(synk): the module's runtime assert (0 <= x <= 1) is not enforced.
    x_min = jnp.min(xf)
    x_max = jnp.max(xf)
    xt_min = 2.0 * x_min - 1.0
    xt_max = 2.0 * x_max - 1.0

    t0_t = 2.0 * t0 - 1.0
    t1_t = 2.0 * t1 - 1.0
    a_t0 = jnp.where(t0_t > 0.0, a1, a0)
    a_t1 = jnp.where(t1_t > 0.0, a1, a0)

    def external_consts(t, s, a):
        # max|xt - t| over the tensor is attained at min(x) or max(x);
        # |y| = |d|/(s+|d|) is monotone in |d| for s > 0, so:
        m = jnp.maximum(xt_max - t, t - xt_min)
        max_abs_y = m / (s + m)
        inv_div = (1.0 - a) / max_abs_y     # == 1 / (max|y| / (1 - a))
        off = jnp.sign(t) * a
        return inv_div, off

    def internal_consts(t, s, a):
        shift = t / (s + jnp.abs(t))
        mult = a / jnp.abs(shift)
        return shift, mult

    inv_div0, off0 = external_consts(t0_t, scales[0], a_t0)
    shift1, mult1 = internal_consts(t0_t, scales[1], a_t0)
    shift2, mult2 = internal_consts(t1_t, scales[2], a_t1)
    inv_div3, off3 = external_consts(t1_t, scales[3], a_t1)

    params = jnp.stack([
        t0_t, t1_t, scales[0], scales[1], scales[2], scales[3],
        inv_div0, off0, shift1, mult1, shift2, mult2, inv_div3, off3,
    ]).astype(jnp.float32)

    # ---- Lane-dense 2-D layout, padded to an exact tiling -------------------
    lane = _LANE
    rows = -(-total // lane)
    if rows < block_rows:
        block_rows = max(8, ((rows + 7) // 8) * 8)   # single small block
    padded_rows = -(-rows // block_rows) * block_rows
    padded_total = padded_rows * lane
    if padded_total != total:
        xf = jnp.pad(xf, (0, padded_total - total))  # zeros -> finite math, dropped
    x2d = xf.reshape(padded_rows, lane)

    grid = (padded_rows // block_rows,)

    grid_spec = pltpu.PrefetchScalarGridSpec(
        num_scalar_prefetch=1,
        grid=grid,
        in_specs=[pl.BlockSpec((block_rows, lane), lambda i, p: (i, 0))],
        out_specs=pl.BlockSpec((block_rows, lane), lambda i, p: (i, 0)),
    )

    out2d = pl.pallas_call(
        _two_step_kernel,
        out_shape=jax.ShapeDtypeStruct(x2d.shape, jnp.float32),
        grid_spec=grid_spec,
        compiler_params=pltpu.CompilerParams(
            dimension_semantics=("parallel",),          # 2 TCs on v7x
            vmem_limit_bytes=48 * 1024 * 1024,          # fits v5e/v6e/v7x
        ),
    )(params, x2d)

    return out2d.reshape(-1)[:total].reshape(orig_shape)


def _reference(x, a0, a1, t0, t1, scales):
    """Pure-JAX reference mirroring the PyTorch forward (for verification)."""
    xt = 2.0 * x - 1.0
    t0_t, t1_t = 2.0 * t0 - 1.0, 2.0 * t1 - 1.0

    def softsign(t, s, internal):
        a = jnp.where(t > 0.0, a1, a0)
        y = xt - t
        y = y / (s + jnp.abs(y))
        if internal:
            shift = t / (s + jnp.abs(t))
            y = y + shift
            return a * y / jnp.abs(shift)
        div = jnp.max(jnp.abs(y)) / (1.0 - a)
        return y / div + jnp.sign(t) * a

    xs = [
        softsign(t0_t, scales[0], False),
        softsign(t0_t, scales[1], True),
        softsign(t1_t, scales[2], True),
        softsign(t1_t, scales[3], False),
    ]
    masks = [
        (xt < t0_t).astype(jnp.float32),
        ((t0_t <= xt) & (xt < 0.0)).astype(jnp.float32),
        ((0.0 <= xt) & (xt < t1_t)).astype(jnp.float32),
        (t1_t <= xt).astype(jnp.float32),
    ]
    return sum(m * xx for m, xx in zip(masks, xs))


if __name__ == "__main__":
    # Deterministic parameter init (module __init__ defaults, init_scales_div=1).
    a0 = jnp.float32(0.5)
    a1 = jnp.float32(0.5)
    t0 = jnp.float32(0.25)
    t1 = jnp.float32(0.75)
    scales = jnp.ones((4,), dtype=jnp.float32)

    key = jax.random.PRNGKey(0)

    # Primary check: the module-sized input.
    x = jax.random.uniform(key, (2, 4, 16, 16), dtype=jnp.float32)  # in [0, 1)
    out = jax.block_until_ready(two_step_function(x, a0, a1, t0, t1, scales))
    ref = _reference(x, a0, a1, t0, t1, scales)
    assert out.shape == x.shape and out.dtype == jnp.float32
    assert jnp.allclose(out, ref, atol=1e-5, rtol=1e-5)

    # Secondary check: multi-block grid (rows=24, block_rows=8 -> grid=(3,)).
    k1, k2 = jax.random.split(key)
    x2 = jax.random.uniform(k1, (2, 4, 32, 96), dtype=jnp.float32)
    out2 = jax.block_until_ready(
        two_step_function(x2, a0, a1, t0, t1, scales, block_rows=8))
    assert jnp.allclose(out2, _reference(x2, a0, a1, t0, t1, scales),
                        atol=1e-5, rtol=1e-5)

    # Tertiary check: ragged size (exercises the lane-dense padding path).
    x3 = jax.random.uniform(k2, (2, 3, 30, 30), dtype=jnp.float32)
    out3 = jax.block_until_ready(two_step_function(x3, a0, a1, t0, t1, scales))
    assert jnp.allclose(out3, _reference(x3, a0, a1, t0, t1, scales),
                        atol=1e-5, rtol=1e-5)

    print("KERNEL_OK")
</pallas_src>

<mosaic_0001>
module attributes {stable_mosaic.version = 11 : i64} {
  func.func @_two_step_kernel(%arg0: i32, %arg1: memref<14xf32, #tpu.memory_space<smem>>, %arg2: memref<8x1024xf32, #tpu.memory_space<vmem>>, %arg3: memref<8x1024xf32, #tpu.memory_space<vmem>>) attributes {dimension_semantics = [#tpu.dimension_semantics<parallel>], iteration_bounds = array<i64: 1>, scalar_prefetch = 1 : i64, scratch_operands = 0 : i64, tpu.core_type = #tpu.core_type<tc>, window_params = [{transform_indices = @transform_0, window_bounds = array<i64: 8, 1024>}, {transform_indices = @transform_1, window_bounds = array<i64: 8, 1024>}]} {
    %c0 = arith.constant 0 : index
    %0 = memref.load %arg1[%c0] : memref<14xf32, #tpu.memory_space<smem>>
    %c1 = arith.constant 1 : index
    %1 = memref.load %arg1[%c1] : memref<14xf32, #tpu.memory_space<smem>>
    %c2 = arith.constant 2 : index
    %2 = memref.load %arg1[%c2] : memref<14xf32, #tpu.memory_space<smem>>
    %c3 = arith.constant 3 : index
    %3 = memref.load %arg1[%c3] : memref<14xf32, #tpu.memory_space<smem>>
    %c4 = arith.constant 4 : index
    %4 = memref.load %arg1[%c4] : memref<14xf32, #tpu.memory_space<smem>>
    %c5 = arith.constant 5 : index
    %5 = memref.load %arg1[%c5] : memref<14xf32, #tpu.memory_space<smem>>
    %c6 = arith.constant 6 : index
    %6 = memref.load %arg1[%c6] : memref<14xf32, #tpu.memory_space<smem>>
    %c7 = arith.constant 7 : index
    %7 = memref.load %arg1[%c7] : memref<14xf32, #tpu.memory_space<smem>>
    %c8 = arith.constant 8 : index
    %8 = memref.load %arg1[%c8] : memref<14xf32, #tpu.memory_space<smem>>
    %c9 = arith.constant 9 : index
    %9 = memref.load %arg1[%c9] : memref<14xf32, #tpu.memory_space<smem>>
    %c10 = arith.constant 10 : index
    %10 = memref.load %arg1[%c10] : memref<14xf32, #tpu.memory_space<smem>>
    %c11 = arith.constant 11 : index
    %11 = memref.load %arg1[%c11] : memref<14xf32, #tpu.memory_space<smem>>
    %c12 = arith.constant 12 : index
    %12 = memref.load %arg1[%c12] : memref<14xf32, #tpu.memory_space<smem>>
    %c13 = arith.constant 13 : index
    %13 = memref.load %arg1[%c13] : memref<14xf32, #tpu.memory_space<smem>>
    %c0_0 = arith.constant 0 : index
    %c0_1 = arith.constant 0 : index
    %14 = vector.load %arg2[%c0_0, %c0_1] : memref<8x1024xf32, #tpu.memory_space<vmem>>, vector<8x1024xf32>
    %cst = arith.constant 2.000000e+00 : f32
    %15 = vector.broadcast %cst : f32 to vector<8x1024xf32>
    %16 = arith.mulf %15, %14 : vector<8x1024xf32>
    %cst_2 = arith.constant 1.000000e+00 : f32
    %17 = vector.broadcast %cst_2 : f32 to vector<8x1024xf32>
    %18 = arith.subf %16, %17 : vector<8x1024xf32>
    %19 = vector.broadcast %0 : f32 to vector<8x1024xf32>
    %20 = arith.subf %18, %19 : vector<8x1024xf32>
    %21 = math.absf %20 : vector<8x1024xf32>
    %22 = vector.broadcast %1 : f32 to vector<8x1024xf32>
    %23 = arith.subf %18, %22 : vector<8x1024xf32>
    %24 = math.absf %23 : vector<8x1024xf32>
    %25 = vector.broadcast %2 : f32 to vector<8x1024xf32>
    %26 = arith.addf %25, %21 : vector<8x1024xf32>
    %27 = tpu.reciprocal %26 {approx = true} : vector<8x1024xf32> -> vector<8x1024xf32>
    %28 = arith.mulf %26, %27 : vector<8x1024xf32>
    %cst_3 = arith.constant 2.000000e+00 : f32
    %29 = vector.broadcast %cst_3 : f32 to vector<8x1024xf32>
    %30 = arith.subf %29, %28 : vector<8x1024xf32>
    %31 = arith.mulf %27, %30 : vector<8x1024xf32>
    %32 = arith.mulf %20, %31 : vector<8x1024xf32>
    %33 = vector.broadcast %3 : f32 to vector<8x1024xf32>
    %34 = arith.addf %33, %21 : vector<8x1024xf32>
    %35 = tpu.reciprocal %34 {approx = true} : vector<8x1024xf32> -> vector<8x1024xf32>
    %36 = arith.mulf %34, %35 : vector<8x1024xf32>
    %cst_4 = arith.constant 2.000000e+00 : f32
    %37 = vector.broadcast %cst_4 : f32 to vector<8x1024xf32>
    %38 = arith.subf %37, %36 : vector<8x1024xf32>
    %39 = arith.mulf %35, %38 : vector<8x1024xf32>
    %40 = arith.mulf %20, %39 : vector<8x1024xf32>
    %41 = vector.broadcast %4 : f32 to vector<8x1024xf32>
    %42 = arith.addf %41, %24 : vector<8x1024xf32>
    %43 = tpu.reciprocal %42 {approx = true} : vector<8x1024xf32> -> vector<8x1024xf32>
    %44 = arith.mulf %42, %43 : vector<8x1024xf32>
    %cst_5 = arith.constant 2.000000e+00 : f32
    %45 = vector.broadcast %cst_5 : f32 to vector<8x1024xf32>
    %46 = arith.subf %45, %44 : vector<8x1024xf32>
    %47 = arith.mulf %43, %46 : vector<8x1024xf32>
    %48 = arith.mulf %23, %47 : vector<8x1024xf32>
    %49 = vector.broadcast %5 : f32 to vector<8x1024xf32>
    %50 = arith.addf %49, %24 : vector<8x1024xf32>
    %51 = tpu.reciprocal %50 {approx = true} : vector<8x1024xf32> -> vector<8x1024xf32>
    %52 = arith.mulf %50, %51 : vector<8x1024xf32>
    %cst_6 = arith.constant 2.000000e+00 : f32
    %53 = vector.broadcast %cst_6 : f32 to vector<8x1024xf32>
    %54 = arith.subf %53, %52 : vector<8x1024xf32>
    %55 = arith.mulf %51, %54 : vector<8x1024xf32>
    %56 = arith.mulf %23, %55 : vector<8x1024xf32>
    %57 = vector.broadcast %6 : f32 to vector<8x1024xf32>
    %58 = arith.mulf %32, %57 : vector<8x1024xf32>
    %59 = vector.broadcast %7 : f32 to vector<8x1024xf32>
    %60 = arith.addf %58, %59 : vector<8x1024xf32>
    %61 = vector.broadcast %8 : f32 to vector<8x1024xf32>
    %62 = arith.addf %40, %61 : vector<8x1024xf32>
    %63 = vector.broadcast %9 : f32 to vector<8x1024xf32>
    %64 = arith.mulf %62, %63 : vector<8x1024xf32>
    %65 = vector.broadcast %10 : f32 to vector<8x1024xf32>
    %66 = arith.addf %48, %65 : vector<8x1024xf32>
    %67 = vector.broadcast %11 : f32 to vector<8x1024xf32>
    %68 = arith.mulf %66, %67 : vector<8x1024xf32>
    %69 = vector.broadcast %12 : f32 to vector<8x1024xf32>
    %70 = arith.mulf %56, %69 : vector<8x1024xf32>
    %71 = vector.broadcast %13 : f32 to vector<8x1024xf32>
    %72 = arith.addf %70, %71 : vector<8x1024xf32>
    %73 = vector.broadcast %0 : f32 to vector<8x1024xf32>
    %74 = arith.cmpf olt, %18, %73 : vector<8x1024xf32>
    %75 = vector.broadcast %0 : f32 to vector<8x1024xf32>
    %76 = arith.cmpf ole, %75, %18 : vector<8x1024xf32>
    %cst_7 = arith.constant 0.000000e+00 : f32
    %77 = vector.broadcast %cst_7 : f32 to vector<8x1024xf32>
    %78 = arith.cmpf olt, %18, %77 : vector<8x1024xf32>
    %79 = arith.andi %76, %78 : vector<8x1024xi1>
    %cst_8 = arith.constant 0.000000e+00 : f32
    %80 = vector.broadcast %cst_8 : f32 to vector<8x1024xf32>
    %81 = arith.cmpf ole, %80, %18 : vector<8x1024xf32>
    %82 = vector.broadcast %1 : f32 to vector<8x1024xf32>
    %83 = arith.cmpf olt, %18, %82 : vector<8x1024xf32>
    %84 = arith.andi %81, %83 : vector<8x1024xi1>
    %85 = vector.broadcast %1 : f32 to vector<8x1024xf32>
    %86 = arith.cmpf ole, %85, %18 : vector<8x1024xf32>
    %cst_9 = arith.constant 0.000000e+00 : f32
    %87 = vector.broadcast %cst_9 : f32 to vector<8x1024xf32>
    %88 = arith.select %74, %60, %87 : vector<8x1024xi1>, vector<8x1024xf32>
    %cst_10 = arith.constant 0.000000e+00 : f32
    %89 = vector.broadcast %cst_10 : f32 to vector<8x1024xf32>
    %90 = arith.select %79, %64, %89 : vector<8x1024xi1>, vector<8x1024xf32>
    %91 = arith.addf %88, %90 : vector<8x1024xf32>
    %cst_11 = arith.constant 0.000000e+00 : f32
    %92 = vector.broadcast %cst_11 : f32 to vector<8x1024xf32>
    %93 = arith.select %84, %68, %92 : vector<8x1024xi1>, vector<8x1024xf32>
    %94 = arith.addf %91, %93 : vector<8x1024xf32>
    %cst_12 = arith.constant 0.000000e+00 : f32
    %95 = vector.broadcast %cst_12 : f32 to vector<8x1024xf32>
    %96 = arith.select %86, %72, %95 : vector<8x1024xi1>, vector<8x1024xf32>
    %97 = arith.addf %94, %96 : vector<8x1024xf32>
    %c0_13 = arith.constant 0 : index
    %c0_14 = arith.constant 0 : index
    %98 = vector.load %arg3[%c0_13, %c0_14] : memref<8x1024xf32, #tpu.memory_space<vmem>>, vector<8x1024xf32>
    tpu.vector_store %arg3[%c0_13, %c0_14], %97 {strides = array<i32>} : memref<8x1024xf32, #tpu.memory_space<vmem>>, vector<8x1024xf32>,
    return
  }
  func.func @transform_0(%arg0: i32, %arg1: memref<14xf32, #tpu.memory_space<smem>>) -> (i32, i32) {
    %c0_i32 = arith.constant 0 : i32
    %c0_i32_0 = arith.constant 0 : i32
    return %arg0, %c0_i32 : i32, i32
  }
  func.func @transform_1(%arg0: i32, %arg1: memref<14xf32, #tpu.memory_space<smem>>) -> (i32, i32) {
    %c0_i32 = arith.constant 0 : i32
    %c0_i32_0 = arith.constant 0 : i32
    return %arg0, %c0_i32 : i32, i32
  }
}

</mosaic_0001>

<llo_original>
// kernel: tpu_custom_call.1
$region0: #{tpu_custom_call.1}
  #allocation0 [shape = 'u32[]', space=smem, size = 0x4, offset = 0x4, fixed_abs, tag = 'smem constant byte address 0x4 - core index']
  #allocation1 [shape = 'u32[72,128]{1,0:T(1,128)}', space=vmem, size = 0x9000, scoped, tag = 'internal scratch']
  #allocation2 [shape = 's32[1]{0}', space=sflag, size = 0x4, scoped, tag = 'scoped memory for tpu_custom_call.1']
  #allocation3 [shape = 'u8[512]{0}', space=smem, size = 0x200, scoped, tag = 'prefetched SMEM operand 0']
  %s0 = inlined_call_operand.hbm [shape: f32[14], index: 0, kind: input, shape index: {}]
  %s1 = inlined_call_operand.hbm [shape: f32[8,1024], index: 1, kind: input, shape index: {}]
  %s2 = inlined_call_operand.hbm [shape: f32[8,1024], index: 2, kind: output, shape index: {}]
  %s3 = sld [smem:[#allocation0]]
  $region18: #{tpu_custom_call.1} parent=0
    _
  %s5 = ssub.s32 1, %s3
  %s6 = scalar_select 0, %s5, %s3
  %s8 = sshll.u32 %s0, 4
  %s9 = int_to_ptr.hbm [resolvable:$true] %s8
  %11 = dma.hbm_to_smem %s9, 16, [#allocation3], [#allocation2]
  %13 = dma.done [#allocation2], 16
  %14 = sfence
  $region1: #{tpu_custom_call.1} parent=0
    #allocation4 [shape = 'u8[32768]{0}', space=vmem, size = 0x8000, scoped, tag = 'input window, operand 1, single buffered']
    #allocation5 [shape = 's32[1]{0}', space=sflag, size = 0x4, scoped, tag = 'scoped memory for tpu_custom_call.1']
    #allocation6 [shape = 's32[1]{0}', space=sflag, size = 0x4, scoped, tag = 'scoped memory for tpu_custom_call.1']
    #allocation7 [shape = 'u8[32768]{0}', space=vmem, size = 0x8000, scoped, tag = 'output window, operand 0, single buffered']
    %15 = vsyncpa [#allocation5], 0
    %16 = vsyncpa [#allocation6], 0
    // Predicated region
    $region2: #{tpu_custom_call.1} parent=1 // pred_check
      _
    $region3: #{tpu_custom_call.1} parent=1 // pred_check_branch
      %18 = sbr.rel (0) target = $region5
    $region4: #{tpu_custom_call.1} parent=1 // pred_region
      %20 = vsyncadd [#allocation5], 0
      %s22 = sshll.u32 %s1, 4
      %s23 = int_to_ptr.hbm [resolvable:$true] %s22
      %s24 = sshll.u32 [#allocation4], 4
      %s25 = int_to_ptr.vmem [resolvable:$true] %s24
      %27 = dma.hbm_to_vmem [thread:$0]  %s23, 1024, %s25, [#allocation5]
    $region5: #{tpu_custom_call.1} parent=1 // pred_fallthru
      _
    // Predicated region
    $region6: #{tpu_custom_call.1} parent=1 // pred_check
      _
    $region7: #{tpu_custom_call.1} parent=1 // pred_check_branch
      %29 = sbr.rel (0) target = $region9
    $region8: #{tpu_custom_call.1} parent=1 // pred_region
      %31 = dma.done [#allocation5], 1024
    $region9: #{tpu_custom_call.1} parent=1 // pred_fallthru
      _
    %s32 = sld [smem:[#allocation3]]
    %s33 = sld [smem:[#allocation3 + $0x1]]
    %s34 = sld [smem:[#allocation3 + $0x2]]
    %s35 = sld [smem:[#allocation3 + $0x3]]
    %s36 = sld [smem:[#allocation3 + $0x4]]
    %s37 = sld [smem:[#allocation3 + $0x5]]
    %s38 = sld [smem:[#allocation3 + $0x6]]
    %s39 = sld [smem:[#allocation3 + $0x7]]
    %s40 = sld [smem:[#allocation3 + $0x8]]
    %s41 = sld [smem:[#allocation3 + $0x9]]
    %s42 = sld [smem:[#allocation3 + $0xa]]
    %s43 = sld [smem:[#allocation3 + $0xb]]
    %s44 = sld [smem:[#allocation3 + $0xc]]
    %s45 = sld [smem:[#allocation3 + $0xd]]
    %v46 = vld [vmem:[#allocation4] sm:$0xff]
    %v47 = vld [vmem:[#allocation4 + $0x8] sm:$0xff]
    %v48 = vld [vmem:[#allocation4 + $0x10] sm:$0xff]
    %v49 = vld [vmem:[#allocation4 + $0x18] sm:$0xff]
    %v50 = vld [vmem:[#allocation4 + $0x20] sm:$0xff]
    %v51 = vld [vmem:[#allocation4 + $0x28] sm:$0xff]
    %v52 = vld [vmem:[#allocation4 + $0x30] sm:$0xff]
    %v53 = vld [vmem:[#allocation4 + $0x38] sm:$0xff]
    %v54 = vmul.f32 %v46, 2.0
    %v55 = vmul.f32 %v47, 2.0
    %v56 = vmul.f32 %v48, 2.0
    %v57 = vmul.f32 %v49, 2.0
    %v58 = vmul.f32 %v50, 2.0
    %v59 = vmul.f32 %v51, 2.0
    %v60 = vmul.f32 %v52, 2.0
    %v61 = vmul.f32 %v53, 2.0
    %v62 = vsub.f32 %v54, 1.0
    %v63 = vsub.f32 %v55, 1.0
    %v64 = vsub.f32 %v56, 1.0
    %v65 = vsub.f32 %v57, 1.0
    %v66 = vsub.f32 %v58, 1.0
    %v67 = vsub.f32 %v59, 1.0
    %v68 = vsub.f32 %v60, 1.0
    %v69 = vsub.f32 %v61, 1.0
    %v70 = vstv %s32
    %v71 = vsub.f32 %v62, %v70
    %v72 = vsub.f32 %v63, %v70
    %v73 = vsub.f32 %v64, %v70
    %v74 = vsub.f32 %v65, %v70
    %v75 = vsub.f32 %v66, %v70
    %v76 = vsub.f32 %v67, %v70
    %v77 = vsub.f32 %v68, %v70
    %v78 = vsub.f32 %v69, %v70
    %v79 = vand.u32 2147483647, %v71
    %v80 = vand.u32 2147483647, %v72
    %v81 = vand.u32 2147483647, %v73
    %v82 = vand.u32 2147483647, %v74
    %v83 = vand.u32 2147483647, %v75
    %v84 = vand.u32 2147483647, %v76
    %v85 = vand.u32 2147483647, %v77
    %v86 = vand.u32 2147483647, %v78
    %v87 = vstv %s33
    %v88 = vsub.f32 %v62, %v87
    %v89 = vsub.f32 %v63, %v87
    %v90 = vsub.f32 %v64, %v87
    %v91 = vsub.f32 %v65, %v87
    %v92 = vsub.f32 %v66, %v87
    %v93 = vsub.f32 %v67, %v87
    %v94 = vsub.f32 %v68, %v87
    %v95 = vsub.f32 %v69, %v87
    %v96 = vand.u32 2147483647, %v88
    %v97 = vand.u32 2147483647, %v89
    %v98 = vand.u32 2147483647, %v90
    %v99 = vand.u32 2147483647, %v91
    %v100 = vand.u32 2147483647, %v92
    %v101 = vand.u32 2147483647, %v93
    %v102 = vand.u32 2147483647, %v94
    %v103 = vand.u32 2147483647, %v95
    %v104 = vstv %s34
    %v105 = vadd.f32 %v104, %v79
    %v106 = vadd.f32 %v104, %v80
    %v107 = vadd.f32 %v104, %v81
    %v108 = vadd.f32 %v104, %v82
    %v109 = vadd.f32 %v104, %v83
    %v110 = vadd.f32 %v104, %v84
    %v111 = vadd.f32 %v104, %v85
    %v112 = vadd.f32 %v104, %v86
    %v113 = vrcp.pop %v105
    %v114 = vrcp.pop %v106
    %v115 = vrcp.pop %v107
    %v116 = vrcp.pop %v108
    %v117 = vrcp.pop %v109
    %v118 = vrcp.pop %v110
    %v119 = vrcp.pop %v111
    %v120 = vrcp.pop %v112
    %v121 = vmul.f32 %v105, %v113
    %v122 = vmul.f32 %v106, %v114
    %v123 = vmul.f32 %v107, %v115
    %v124 = vmul.f32 %v108, %v116
    %v125 = vmul.f32 %v109, %v117
    %v126 = vmul.f32 %v110, %v118
    %v127 = vmul.f32 %v111, %v119
    %v128 = vmul.f32 %v112, %v120
    %v129 = vsub.f32 2.0, %v121
    %v130 = vsub.f32 2.0, %v122
    %v131 = vsub.f32 2.0, %v123
    %v132 = vsub.f32 2.0, %v124
    %v133 = vsub.f32 2.0, %v125
    %v134 = vsub.f32 2.0, %v126
    %v135 = vsub.f32 2.0, %v127
    %v136 = vsub.f32 2.0, %v128
    %v137 = vmul.f32 %v113, %v129
    %v138 = vmul.f32 %v114, %v130
    %v139 = vmul.f32 %v115, %v131
    %v140 = vmul.f32 %v116, %v132
    %v141 = vmul.f32 %v117, %v133
    %v142 = vmul.f32 %v118, %v134
    %v143 = vmul.f32 %v119, %v135
    %v144 = vmul.f32 %v120, %v136
    %v145 = vmul.f32 %v71, %v137
    %v146 = vmul.f32 %v72, %v138
    %v147 = vmul.f32 %v73, %v139
    %v148 = vmul.f32 %v74, %v140
    %v149 = vmul.f32 %v75, %v141
    %v150 = vmul.f32 %v76, %v142
    %v151 = vmul.f32 %v77, %v143
    %v152 = vmul.f32 %v78, %v144
    %v153 = vstv %s35
    %v154 = vadd.f32 %v153, %v79
    %v155 = vadd.f32 %v153, %v80
    %v156 = vadd.f32 %v153, %v81
    %v157 = vadd.f32 %v153, %v82
    %v158 = vadd.f32 %v153, %v83
    %v159 = vadd.f32 %v153, %v84
    %v160 = vadd.f32 %v153, %v85
    %v161 = vadd.f32 %v153, %v86
    %v162 = vrcp.pop %v154
    %v163 = vrcp.pop %v155
    %v164 = vrcp.pop %v156
    %v165 = vrcp.pop %v157
    %v166 = vrcp.pop %v158
    %v167 = vrcp.pop %v159
    %v168 = vrcp.pop %v160
    %v169 = vrcp.pop %v161
    %v170 = vmul.f32 %v154, %v162
    %v171 = vmul.f32 %v155, %v163
    %v172 = vmul.f32 %v156, %v164
    %v173 = vmul.f32 %v157, %v165
    %v174 = vmul.f32 %v158, %v166
    %v175 = vmul.f32 %v159, %v167
    %v176 = vmul.f32 %v160, %v168
    %v177 = vmul.f32 %v161, %v169
    %v178 = vsub.f32 2.0, %v170
    %v179 = vsub.f32 2.0, %v171
    %v180 = vsub.f32 2.0, %v172
    %v181 = vsub.f32 2.0, %v173
    %v182 = vsub.f32 2.0, %v174
    %v183 = vsub.f32 2.0, %v175
    %v184 = vsub.f32 2.0, %v176
    %v185 = vsub.f32 2.0, %v177
    %v186 = vmul.f32 %v162, %v178
    %v187 = vmul.f32 %v163, %v179
    %v188 = vmul.f32 %v164, %v180
    %v189 = vmul.f32 %v165, %v181
    %v190 = vmul.f32 %v166, %v182
    %v191 = vmul.f32 %v167, %v183
    %v192 = vmul.f32 %v168, %v184
    %v193 = vmul.f32 %v169, %v185
    %v194 = vmul.f32 %v71, %v186
    %v195 = vmul.f32 %v72, %v187
    %v196 = vmul.f32 %v73, %v188
    %v197 = vmul.f32 %v74, %v189
    %v198 = vmul.f32 %v75, %v190
    %v199 = vmul.f32 %v76, %v191
    %v200 = vmul.f32 %v77, %v192
    %v201 = vmul.f32 %v78, %v193
    %v202 = vstv %s36
    %v203 = vadd.f32 %v202, %v96
    %v204 = vadd.f32 %v202, %v97
    %v205 = vadd.f32 %v202, %v98
    %v206 = vadd.f32 %v202, %v99
    %v207 = vadd.f32 %v202, %v100
    %v208 = vadd.f32 %v202, %v101
    %v209 = vadd.f32 %v202, %v102
    %v210 = vadd.f32 %v202, %v103
    %v211 = vrcp.pop %v203
    %v212 = vrcp.pop %v204
    %v213 = vrcp.pop %v205
    %v214 = vrcp.pop %v206
    %v215 = vrcp.pop %v207
    %v216 = vrcp.pop %v208
    %v217 = vrcp.pop %v209
    %v218 = vrcp.pop %v210
    %v219 = vmul.f32 %v203, %v211
    %v220 = vmul.f32 %v204, %v212
    %v221 = vmul.f32 %v205, %v213
    %v222 = vmul.f32 %v206, %v214
    %v223 = vmul.f32 %v207, %v215
    %v224 = vmul.f32 %v208, %v216
    %v225 = vmul.f32 %v209, %v217
    %v226 = vmul.f32 %v210, %v218
    %v227 = vsub.f32 2.0, %v219
    %v228 = vsub.f32 2.0, %v220
    %v229 = vsub.f32 2.0, %v221
    %v230 = vsub.f32 2.0, %v222
    %v231 = vsub.f32 2.0, %v223
    %v232 = vsub.f32 2.0, %v224
    %v233 = vsub.f32 2.0, %v225
    %v234 = vsub.f32 2.0, %v226
    %v235 = vmul.f32 %v211, %v227
    %v236 = vmul.f32 %v212, %v228
    %v237 = vmul.f32 %v213, %v229
    %v238 = vmul.f32 %v214, %v230
    %v239 = vmul.f32 %v215, %v231
    %v240 = vmul.f32 %v216, %v232
    %v241 = vmul.f32 %v217, %v233
    %v242 = vmul.f32 %v218, %v234
    %v243 = vmul.f32 %v88, %v235
    %v244 = vmul.f32 %v89, %v236
    %v245 = vmul.f32 %v90, %v237
    %v246 = vmul.f32 %v91, %v238
    %v247 = vmul.f32 %v92, %v239
    %v248 = vmul.f32 %v93, %v240
    %v249 = vmul.f32 %v94, %v241
    %v250 = vmul.f32 %v95, %v242
    %v251 = vstv %s37
    %v252 = vadd.f32 %v251, %v96
    %v253 = vadd.f32 %v251, %v97
    %v254 = vadd.f32 %v251, %v98
    %v255 = vadd.f32 %v251, %v99
    %v256 = vadd.f32 %v251, %v100
    %v257 = vadd.f32 %v251, %v101
    %v258 = vadd.f32 %v251, %v102
    %v259 = vadd.f32 %v251, %v103
    %v260 = vrcp.pop %v252
    %v261 = vrcp.pop %v253
    %v262 = vrcp.pop %v254
    %v263 = vrcp.pop %v255
    %v264 = vrcp.pop %v256
    %v265 = vrcp.pop %v257
    %v266 = vrcp.pop %v258
    %v267 = vrcp.pop %v259
    %v268 = vmul.f32 %v252, %v260
    %v269 = vmul.f32 %v253, %v261
    %v270 = vmul.f32 %v254, %v262
    %v271 = vmul.f32 %v255, %v263
    %v272 = vmul.f32 %v256, %v264
    %v273 = vmul.f32 %v257, %v265
    %v274 = vmul.f32 %v258, %v266
    %v275 = vmul.f32 %v259, %v267
    %v276 = vsub.f32 2.0, %v268
    %v277 = vsub.f32 2.0, %v269
    %v278 = vsub.f32 2.0, %v270
    %v279 = vsub.f32 2.0, %v271
    %v280 = vsub.f32 2.0, %v272
    %v281 = vsub.f32 2.0, %v273
    %v282 = vsub.f32 2.0, %v274
    %v283 = vsub.f32 2.0, %v275
    %v284 = vmul.f32 %v260, %v276
    %v285 = vmul.f32 %v261, %v277
    %v286 = vmul.f32 %v262, %v278
    %v287 = vmul.f32 %v263, %v279
    %v288 = vmul.f32 %v264, %v280
    %v289 = vmul.f32 %v265, %v281
    %v290 = vmul.f32 %v266, %v282
    %v291 = vmul.f32 %v267, %v283
    %v292 = vmul.f32 %v88, %v284
    %v293 = vmul.f32 %v89, %v285
    %v294 = vmul.f32 %v90, %v286
    %v295 = vmul.f32 %v91, %v287
    %v296 = vmul.f32 %v92, %v288
    %v297 = vmul.f32 %v93, %v289
    %v298 = vmul.f32 %v94, %v290
    %v299 = vmul.f32 %v95, %v291
    %v300 = vstv %s38
    %v301 = vmul.f32 %v145, %v300
    %v302 = vmul.f32 %v146, %v300
    %v303 = vmul.f32 %v147, %v300
    %v304 = vmul.f32 %v148, %v300
    %v305 = vmul.f32 %v149, %v300
    %v306 = vmul.f32 %v150, %v300
    %v307 = vmul.f32 %v151, %v300
    %v308 = vmul.f32 %v152, %v300
    %v309 = vstv %s39
    %v310 = vadd.f32 %v301, %v309
    %v311 = vadd.f32 %v302, %v309
    %v312 = vadd.f32 %v303, %v309
    %v313 = vadd.f32 %v304, %v309
    %v314 = vadd.f32 %v305, %v309
    %v315 = vadd.f32 %v306, %v309
    %v316 = vadd.f32 %v307, %v309
    %v317 = vadd.f32 %v308, %v309
    %v318 = vstv %s40
    %v319 = vadd.f32 %v194, %v318
    %v320 = vadd.f32 %v195, %v318
    %v321 = vadd.f32 %v196, %v318
    %v322 = vadd.f32 %v197, %v318
    %v323 = vadd.f32 %v198, %v318
    %v324 = vadd.f32 %v199, %v318
    %v325 = vadd.f32 %v200, %v318
    %v326 = vadd.f32 %v201, %v318
    %v327 = vstv %s41
    %v328 = vmul.f32 %v319, %v327
    %v329 = vmul.f32 %v320, %v327
    %v330 = vmul.f32 %v321, %v327
    %v331 = vmul.f32 %v322, %v327
    %v332 = vmul.f32 %v323, %v327
    %v333 = vmul.f32 %v324, %v327
    %v334 = vmul.f32 %v325, %v327
    %v335 = vmul.f32 %v326, %v327
    %v336 = vstv %s42
    %v337 = vadd.f32 %v243, %v336
    %v338 = vadd.f32 %v244, %v336
    %v339 = vadd.f32 %v245, %v336
    %v340 = vadd.f32 %v246, %v336
    %v341 = vadd.f32 %v247, %v336
    %v342 = vadd.f32 %v248, %v336
    %v343 = vadd.f32 %v249, %v336
    %v344 = vadd.f32 %v250, %v336
    %v345 = vstv %s43
    %v346 = vmul.f32 %v337, %v345
    %v347 = vmul.f32 %v338, %v345
    %v348 = vmul.f32 %v339, %v345
    %v349 = vmul.f32 %v340, %v345
    %v350 = vmul.f32 %v341, %v345
    %v351 = vmul.f32 %v342, %v345
    %v352 = vmul.f32 %v343, %v345
    %v353 = vmul.f32 %v344, %v345
    %v354 = vstv %s44
    %v355 = vmul.f32 %v292, %v354
    %v356 = vmul.f32 %v293, %v354
    %v357 = vmul.f32 %v294, %v354
    %v358 = vmul.f32 %v295, %v354
    %v359 = vmul.f32 %v296, %v354
    %v360 = vmul.f32 %v297, %v354
    %v361 = vmul.f32 %v298, %v354
    %v362 = vmul.f32 %v299, %v354
    %v363 = vstv %s45
    %v364 = vadd.f32 %v355, %v363
    %v365 = vadd.f32 %v356, %v363
    %v366 = vadd.f32 %v357, %v363
    %v367 = vadd.f32 %v358, %v363
    %v368 = vadd.f32 %v359, %v363
    %v369 = vadd.f32 %v360, %v363
    %v370 = vadd.f32 %v361, %v363
    %v371 = vadd.f32 %v362, %v363
    %vm372 = vcmp.lt.f32.partialorder %v62, %v70
    %vm373 = vcmp.lt.f32.partialorder %v63, %v70
    %vm374 = vcmp.lt.f32.partialorder %v64, %v70
    %vm375 = vcmp.lt.f32.partialorder %v65, %v70
    %vm376 = vcmp.lt.f32.partialorder %v66, %v70
    %vm377 = vcmp.lt.f32.partialorder %v67, %v70
    %vm378 = vcmp.lt.f32.partialorder %v68, %v70
    %vm379 = vcmp.lt.f32.partialorder %v69, %v70
    %vm380 = vcmp.le.f32.partialorder %v70, %v62
    %vm381 = vcmp.le.f32.partialorder %v70, %v63
    %vm382 = vcmp.le.f32.partialorder %v70, %v64
    %vm383 = vcmp.le.f32.partialorder %v70, %v65
    %vm384 = vcmp.le.f32.partialorder %v70, %v66
    %vm385 = vcmp.le.f32.partialorder %v70, %v67
    %vm386 = vcmp.le.f32.partialorder %v70, %v68
    %vm387 = vcmp.le.f32.partialorder %v70, %v69
    %vm388 = vcmp.lt.f32.partialorder %v62, 0.0
    %vm389 = vcmp.lt.f32.partialorder %v63, 0.0
    %vm390 = vcmp.lt.f32.partialorder %v64, 0.0
    %vm391 = vcmp.lt.f32.partialorder %v65, 0.0
    %vm392 = vcmp.lt.f32.partialorder %v66, 0.0
    %vm393 = vcmp.lt.f32.partialorder %v67, 0.0
    %vm394 = vcmp.lt.f32.partialorder %v68, 0.0
    %vm395 = vcmp.lt.f32.partialorder %v69, 0.0
    %vm396 = vmand %vm380, %vm388
    %vm397 = vmand %vm381, %vm389
    %vm398 = vmand %vm382, %vm390
    %vm399 = vmand %vm383, %vm391
    %vm400 = vmand %vm384, %vm392
    %vm401 = vmand %vm385, %vm393
    %vm402 = vmand %vm386, %vm394
    %vm403 = vmand %vm387, %vm395
    %vm404 = vcmp.le.f32.partialorder 0.0, %v62
    %vm405 = vcmp.le.f32.partialorder 0.0, %v63
    %vm406 = vcmp.le.f32.partialorder 0.0, %v64
    %vm407 = vcmp.le.f32.partialorder 0.0, %v65
    %vm408 = vcmp.le.f32.partialorder 0.0, %v66
    %vm409 = vcmp.le.f32.partialorder 0.0, %v67
    %vm410 = vcmp.le.f32.partialorder 0.0, %v68
    %vm411 = vcmp.le.f32.partialorder 0.0, %v69
    %vm412 = vcmp.lt.f32.partialorder %v62, %v87
    %vm413 = vcmp.lt.f32.partialorder %v63, %v87
    %vm414 = vcmp.lt.f32.partialorder %v64, %v87
    %vm415 = vcmp.lt.f32.partialorder %v65, %v87
    %vm416 = vcmp.lt.f32.partialorder %v66, %v87
    %vm417 = vcmp.lt.f32.partialorder %v67, %v87
    %vm418 = vcmp.lt.f32.partialorder %v68, %v87
    %vm419 = vcmp.lt.f32.partialorder %v69, %v87
    %vm420 = vmand %vm404, %vm412
    %vm421 = vmand %vm405, %vm413
    %vm422 = vmand %vm406, %vm414
    %vm423 = vmand %vm407, %vm415
    %vm424 = vmand %vm408, %vm416
    %vm425 = vmand %vm409, %vm417
    %vm426 = vmand %vm410, %vm418
    %vm427 = vmand %vm411, %vm419
    %vm428 = vcmp.le.f32.partialorder %v87, %v62
    %vm429 = vcmp.le.f32.partialorder %v87, %v63
    %vm430 = vcmp.le.f32.partialorder %v87, %v64
    %vm431 = vcmp.le.f32.partialorder %v87, %v65
    %vm432 = vcmp.le.f32.partialorder %v87, %v66
    %vm433 = vcmp.le.f32.partialorder %v87, %v67
    %vm434 = vcmp.le.f32.partialorder %v87, %v68
    %vm435 = vcmp.le.f32.partialorder %v87, %v69
    %v436 = vsel %vm372, %v310, 0.0
    %v437 = vsel %vm373, %v311, 0.0
    %v438 = vsel %vm374, %v312, 0.0
    %v439 = vsel %vm375, %v313, 0.0
    %v440 = vsel %vm376, %v314, 0.0
    %v441 = vsel %vm377, %v315, 0.0
    %v442 = vsel %vm378, %v316, 0.0
    %v443 = vsel %vm379, %v317, 0.0
    %v444 = vsel %vm396, %v328, 0.0
    %v445 = vsel %vm397, %v329, 0.0
    %v446 = vsel %vm398, %v330, 0.0
    %v447 = vsel %vm399, %v331, 0.0
    %v448 = vsel %vm400, %v332, 0.0
    %v449 = vsel %vm401, %v333, 0.0
    %v450 = vsel %vm402, %v334, 0.0
    %v451 = vsel %vm403, %v335, 0.0
    %v452 = vadd.f32 %v436, %v444
    %v453 = vadd.f32 %v437, %v445
    %v454 = vadd.f32 %v438, %v446
    %v455 = vadd.f32 %v439, %v447
    %v456 = vadd.f32 %v440, %v448
    %v457 = vadd.f32 %v441, %v449
    %v458 = vadd.f32 %v442, %v450
    %v459 = vadd.f32 %v443, %v451
    %v460 = vsel %vm420, %v346, 0.0
    %v461 = vsel %vm421, %v347, 0.0
    %v462 = vsel %vm422, %v348, 0.0
    %v463 = vsel %vm423, %v349, 0.0
    %v464 = vsel %vm424, %v350, 0.0
    %v465 = vsel %vm425, %v351, 0.0
    %v466 = vsel %vm426, %v352, 0.0
    %v467 = vsel %vm427, %v353, 0.0
    %v468 = vadd.f32 %v452, %v460
    %v469 = vadd.f32 %v453, %v461
    %v470 = vadd.f32 %v454, %v462
    %v471 = vadd.f32 %v455, %v463
    %v472 = vadd.f32 %v456, %v464
    %v473 = vadd.f32 %v457, %v465
    %v474 = vadd.f32 %v458, %v466
    %v475 = vadd.f32 %v459, %v467
    %v476 = vsel %vm428, %v364, 0.0
    %v477 = vsel %vm429, %v365, 0.0
    %v478 = vsel %vm430, %v366, 0.0
    %v479 = vsel %vm431, %v367, 0.0
    %v480 = vsel %vm432, %v368, 0.0
    %v481 = vsel %vm433, %v369, 0.0
    %v482 = vsel %vm434, %v370, 0.0
    %v483 = vsel %vm435, %v371, 0.0
    %v484 = vadd.f32 %v468, %v476
    %v485 = vadd.f32 %v469, %v477
    %v486 = vadd.f32 %v470, %v478
    %v487 = vadd.f32 %v471, %v479
    %v488 = vadd.f32 %v472, %v480
    %v489 = vadd.f32 %v473, %v481
    %v490 = vadd.f32 %v474, %v482
    %v491 = vadd.f32 %v475, %v483
    %492 = vst [vmem:[#allocation7] sm:$0xff] %v484
    %493 = vst [vmem:[#allocation7 + $0x8] sm:$0xff] %v485
    %494 = vst [vmem:[#allocation7 + $0x10] sm:$0xff] %v486
    %495 = vst [vmem:[#allocation7 + $0x18] sm:$0xff] %v487
    %496 = vst [vmem:[#allocation7 + $0x20] sm:$0xff] %v488
    %497 = vst [vmem:[#allocation7 + $0x28] sm:$0xff] %v489
    %498 = vst [vmem:[#allocation7 + $0x30] sm:$0xff] %v490
    %499 = vst [vmem:[#allocation7 + $0x38] sm:$0xff] %v491
    // Predicated region
    $region10: #{tpu_custom_call.1} parent=1 // pred_check
      _
    $region11: #{tpu_custom_call.1} parent=1 // pred_check_branch
      %501 = sbr.rel (0) target = $region13
    $region12: #{tpu_custom_call.1} parent=1 // pred_region
      %503 = vsyncadd [#allocation6], 0
      %s505 = sshll.u32 [#allocation7], 4
      %s506 = int_to_ptr.vmem [resolvable:$true] %s505
      %s507 = sshll.u32 %s2, 4
      %s508 = int_to_ptr.hbm [resolvable:$true] %s507
      %510 = dma.vmem_to_hbm [thread:$0]  %s506, 1024, %s508, [#allocation6]
    $region13: #{tpu_custom_call.1} parent=1 // pred_fallthru
      _
    // Predicated region
    $region14: #{tpu_custom_call.1} parent=1 // pred_check
      _
    $region15: #{tpu_custom_call.1} parent=1 // pred_check_branch
      %512 = sbr.rel (0) target = $region17
    $region16: #{tpu_custom_call.1} parent=1 // pred_region
      %514 = dma.done [#allocation6], 1024
    $region17: #{tpu_custom_call.1} parent=1 // pred_fallthru
      _
    %515 = vsyncpa [#allocation5], 1
    %516 = vsyncpa [#allocation6], 1

</llo_original>
